<compile_context>
chip_gen: v6e
topology: v6e:2x2x1
jax: 0.10.0
libtpu: 0.0.40
codegen_flags: <defaults>
</compile_context>

<pallas_src>
import jax
import jax.numpy as jnp
from jax.experimental import pallas as pl
from jax.experimental.pallas import tpu as pltpu

DIM = 128
BRAND_DIM = 16
CAT_DIM = 16
OTHER_DIM = 11
IN_DIM = DIM + DIM + BRAND_DIM + CAT_DIM + OTHER_DIM   # 299
IN_PAD = 384                                           # next multiple of 128
H1 = 128
H2 = 32


def _round_up(x, m):
    return ((x + m - 1) // m) * m


# ----------------------------- Pallas kernel --------------------------------
def _mlp_kernel(x_ref, w1_ref, b1_ref, w2_ref, b2_ref, w3_ref, b3_ref, o_ref):
    # x tile: (TILE_B, 384) f32, weights resident in VMEM across grid steps.
    h1 = jnp.dot(x_ref[...], w1_ref[...], preferred_element_type=jnp.float32)
    h1 = jnp.maximum(h1 + b1_ref[...], 0.0)                       # Linear+ReLU
    h2 = jnp.dot(h1, w2_ref[...], preferred_element_type=jnp.float32)
    h2 = jnp.maximum(h2 + b2_ref[...], 0.0)                       # Linear+ReLU
    # 32 -> 1 layer as VPU multiply + lane reduce (avoids padded N=1 matmul).
    h3 = jnp.sum(h2 * w3_ref[...], axis=-1, keepdims=True) + b3_ref[...]
    o_ref[...] = jnp.tanh(h3)                                     # Linear+Tanh


def _mlp_pallas(x_pad, w1p, b1, w2, b2, w3_row, b3, *, tile_b):
    Bp = x_pad.shape[0]
    assert Bp % tile_b == 0 and tile_b % 8 == 0

    def resident(shape):
        # Same block every grid step -> stays resident, DMA'd once.
        return pl.BlockSpec(shape, lambda i: (0, 0))

    return pl.pallas_call(
        _mlp_kernel,
        out_shape=jax.ShapeDtypeStruct((Bp, 1), jnp.float32),
        grid_spec=pltpu.PrefetchScalarGridSpec(
            num_scalar_prefetch=0,
            grid=(Bp // tile_b,),
            in_specs=[
                pl.BlockSpec((tile_b, IN_PAD), lambda i: (i, 0)),  # activations
                resident((IN_PAD, H1)),                            # w1 (padded)
                resident((1, H1)),                                 # b1
                resident((H1, H2)),                                # w2
                resident((1, H2)),                                 # b2
                resident((1, H2)),                                 # w3 (row)
                resident((1, 1)),                                  # b3
            ],
            out_specs=pl.BlockSpec((tile_b, 1), lambda i: (i, 0)),
        ),
        compiler_params=pltpu.CompilerParams(
            dimension_semantics=("parallel",),     # megacore split on v7x
            vmem_limit_bytes=32 << 20,             # explicit, safe on all gens
        ),
    )(x_pad, w1p, b1, w2, b2, w3_row, b3)


# ----------------------------- Model wrapper ---------------------------------
def init_params(key, n_brands, n_items, n_users,
                dim=128, brand_dim=16, category_code_dim=16):
    in_dim = dim + dim + category_code_dim + brand_dim + 11  # 299
    ks = jax.random.split(key, 9)

    def linear_init(kw, kb, fan_in, fan_out):
        bound = 1.0 / jnp.sqrt(fan_in)
        w = jax.random.uniform(kw, (fan_in, fan_out), jnp.float32, -bound, bound)
        b = jax.random.uniform(kb, (1, fan_out), jnp.float32, -bound, bound)
        return w, b

    params = {}
    params["users_emb"] = jax.random.normal(ks[0], (n_users, dim), jnp.float32)
    params["items_emb"] = jax.random.normal(ks[1], (n_items, dim), jnp.float32)
    params["brands_emb"] = jax.random.normal(ks[2], (n_brands, brand_dim), jnp.float32)
    params["w1"], params["b1"] = linear_init(ks[3], ks[4], in_dim, 128)
    params["w2"], params["b2"] = linear_init(ks[5], ks[6], 128, 32)
    params["w3"], params["b3"] = linear_init(ks[7], ks[8], 32, 1)
    return params


def content_based_filtering(params, inputs, *, max_tile_b=2048):
    # max_tile_b: 2048-4096 recommended for v7x (64 MiB VMEM); 4096-8192 on
    # v5e/v6e (128 MiB VMEM).
    B = inputs.shape[0]

    # Glue: id extraction, embedding gathers, concat (plain JAX).
    # NOTE: ids live in float32 columns (as in the PyTorch module); exact only
    # up to 2^24 — pass ids as int32 separately for very large tables.
    user_ids = inputs[:, 0].astype(jnp.int32)
    item_ids = inputs[:, 1].astype(jnp.int32)
    brand_ids = inputs[:, 19].astype(jnp.int32)
    otherfeatures = inputs[:, 20:]
    category_code_embeddings = inputs[:, 2:18]

    user_embeddings = jnp.take(params["users_emb"], user_ids, axis=0)
    item_embeddings = jnp.take(params["items_emb"], item_ids, axis=0)
    brand_embeddings = jnp.take(params["brands_emb"], brand_ids, axis=0)

    # Concatenate and pad the feature axis 299 -> 384 (lane-dense tiles).
    hidden = jnp.concatenate(
        (user_embeddings, item_embeddings, brand_embeddings,
         category_code_embeddings, otherfeatures,
         jnp.zeros((B, IN_PAD - IN_DIM), jnp.float32)),
        axis=1).astype(jnp.float32)

    # Batch tiling: tile is a multiple of 8 rows; pad batch to a tile multiple.
    tile_b = min(max_tile_b, _round_up(B, 8))
    Bp = _round_up(B, tile_b)
    if Bp != B:
        hidden = jnp.pad(hidden, ((0, Bp - B), (0, 0)))

    # Pad w1 with zero rows to match the padded feature axis; reshape w3.
    w1p = jnp.pad(params["w1"], ((0, IN_PAD - IN_DIM), (0, 0)))
    w3_row = params["w3"].reshape(1, H2)

    out = _mlp_pallas(hidden, w1p, params["b1"], params["w2"], params["b2"],
                      w3_row, params["b3"], tile_b=tile_b)
    return out[:B]


def _reference(params, inputs):
    # Pure-JAX reference (mirrors the PyTorch forward).
    user_ids = inputs[:, 0].astype(jnp.int32)
    item_ids = inputs[:, 1].astype(jnp.int32)
    brand_ids = inputs[:, 19].astype(jnp.int32)
    x = jnp.concatenate(
        (params["users_emb"][user_ids], params["items_emb"][item_ids],
         params["brands_emb"][brand_ids], inputs[:, 2:18], inputs[:, 20:]),
        axis=1).astype(jnp.float32)
    h = jnp.maximum(x @ params["w1"] + params["b1"], 0.0)
    h = jnp.maximum(h @ params["w2"] + params["b2"], 0.0)
    return jnp.tanh(h @ params["w3"] + params["b3"])


# --------------------------------- main --------------------------------------
if __name__ == "__main__":
    key = jax.random.PRNGKey(0)
    k_param, k_ids, k_feat = jax.random.split(key, 3)

    n_users, n_items, n_brands = 10, 12, 5
    B = 8  # small batch for the smoke test

    params = init_params(k_param, n_brands=n_brands, n_items=n_items,
                         n_users=n_users)

    # Build (B, 31) float inputs: integer-valued id columns + float features.
    ku, ki, kb = jax.random.split(k_ids, 3)
    user_ids = jax.random.randint(ku, (B,), 0, n_users)
    item_ids = jax.random.randint(ki, (B,), 0, n_items)
    brand_ids = jax.random.randint(kb, (B,), 0, n_brands)
    feats = jax.random.normal(k_feat, (B, 31), jnp.float32)
    inputs = feats.at[:, 0].set(user_ids.astype(jnp.float32))
    inputs = inputs.at[:, 1].set(item_ids.astype(jnp.float32))
    inputs = inputs.at[:, 19].set(brand_ids.astype(jnp.float32))

    out = content_based_filtering(params, inputs)
    out = jax.block_until_ready(out)

    ref = _reference(params, inputs)
    assert out.shape == (B, 1)
    assert jnp.allclose(out, ref, atol=1e-5, rtol=1e-5)

    print("KERNEL_OK")
</pallas_src>

<mosaic_0001>
module attributes {stable_mosaic.version = 11 : i64} {
  func.func @_mlp_kernel(%arg0: i32, %arg1: memref<8x384xf32, #tpu.memory_space<vmem>>, %arg2: memref<384x128xf32, #tpu.memory_space<vmem>>, %arg3: memref<1x128xf32, #tpu.memory_space<vmem>>, %arg4: memref<128x32xf32, #tpu.memory_space<vmem>>, %arg5: memref<1x32xf32, #tpu.memory_space<vmem>>, %arg6: memref<1x32xf32, #tpu.memory_space<vmem>>, %arg7: memref<1x1xf32, #tpu.memory_space<vmem>>, %arg8: memref<8x1xf32, #tpu.memory_space<vmem>>) attributes {dimension_semantics = [#tpu.dimension_semantics<parallel>], iteration_bounds = array<i64: 1>, scalar_prefetch = 0 : i64, scratch_operands = 0 : i64, tpu.core_type = #tpu.core_type<tc>, window_params = [{transform_indices = @transform_0, window_bounds = array<i64: 8, 384>}, {pipeline_mode = #tpu.pipeline_mode<synchronous>, transform_indices = @transform_1, window_bounds = array<i64: 384, 128>}, {pipeline_mode = #tpu.pipeline_mode<synchronous>, transform_indices = @transform_2, window_bounds = array<i64: 1, 128>}, {pipeline_mode = #tpu.pipeline_mode<synchronous>, transform_indices = @transform_3, window_bounds = array<i64: 128, 32>}, {pipeline_mode = #tpu.pipeline_mode<synchronous>, transform_indices = @transform_4, window_bounds = array<i64: 1, 32>}, {pipeline_mode = #tpu.pipeline_mode<synchronous>, transform_indices = @transform_5, window_bounds = array<i64: 1, 32>}, {pipeline_mode = #tpu.pipeline_mode<synchronous>, transform_indices = @transform_6, window_bounds = array<i64: 1, 1>}, {transform_indices = @transform_7, window_bounds = array<i64: 8, 1>}]} {
    %c0 = arith.constant 0 : index
    %c0_0 = arith.constant 0 : index
    %0 = vector.load %arg1[%c0, %c0_0] : memref<8x384xf32, #tpu.memory_space<vmem>>, vector<8x384xf32>
    %c0_1 = arith.constant 0 : index
    %c0_2 = arith.constant 0 : index
    %1 = vector.load %arg2[%c0_1, %c0_2] : memref<384x128xf32, #tpu.memory_space<vmem>>, vector<384x128xf32>
    %cst = arith.constant dense<0.000000e+00> : vector<8x128xf32>
    %2 = tpu.matmul %0, %1, %cst {dimension_numbers = #tpu.dot_dimension_numbers<[1], [0], [0], [1], [0, 0, 1, 1], [], []>} : vector<8x384xf32>, vector<384x128xf32>, vector<8x128xf32> -> vector<8x128xf32>
    %c0_3 = arith.constant 0 : index
    %c0_4 = arith.constant 0 : index
    %3 = vector.load %arg3[%c0_3, %c0_4] : memref<1x128xf32, #tpu.memory_space<vmem>>, vector<1x128xf32>
    %4 = vector.broadcast %3 : vector<1x128xf32> to vector<8x128xf32>
    %5 = arith.addf %2, %4 : vector<8x128xf32>
    %cst_5 = arith.constant 0.000000e+00 : f32
    %6 = vector.broadcast %cst_5 : f32 to vector<8x128xf32>
    %7 = arith.maximumf %5, %6 : vector<8x128xf32>
    %c0_6 = arith.constant 0 : index
    %c0_7 = arith.constant 0 : index
    %8 = vector.load %arg4[%c0_6, %c0_7] : memref<128x32xf32, #tpu.memory_space<vmem>>, vector<128x32xf32>
    %cst_8 = arith.constant dense<0.000000e+00> : vector<8x32xf32>
    %9 = tpu.matmul %7, %8, %cst_8 {dimension_numbers = #tpu.dot_dimension_numbers<[1], [0], [0], [1], [0, 0, 1, 1], [], []>} : vector<8x128xf32>, vector<128x32xf32>, vector<8x32xf32> -> vector<8x32xf32>
    %c0_9 = arith.constant 0 : index
    %c0_10 = arith.constant 0 : index
    %10 = vector.load %arg5[%c0_9, %c0_10] : memref<1x32xf32, #tpu.memory_space<vmem>>, vector<1x32xf32>
    %11 = vector.broadcast %10 : vector<1x32xf32> to vector<8x32xf32>
    %12 = arith.addf %9, %11 : vector<8x32xf32>
    %cst_11 = arith.constant 0.000000e+00 : f32
    %13 = vector.broadcast %cst_11 : f32 to vector<8x32xf32>
    %14 = arith.maximumf %12, %13 : vector<8x32xf32>
    %c0_12 = arith.constant 0 : index
    %c0_13 = arith.constant 0 : index
    %15 = vector.load %arg6[%c0_12, %c0_13] : memref<1x32xf32, #tpu.memory_space<vmem>>, vector<1x32xf32>
    %16 = vector.broadcast %15 : vector<1x32xf32> to vector<8x32xf32>
    %17 = arith.mulf %14, %16 : vector<8x32xf32>
    %cst_14 = arith.constant dense<0.000000e+00> : vector<8xf32>
    %18 = vector.multi_reduction <add>, %17, %cst_14 [1] : vector<8x32xf32> to vector<8xf32>
    %19 = vector.shape_cast %18 : vector<8xf32> to vector<8x1xf32>
    %c0_15 = arith.constant 0 : index
    %c0_16 = arith.constant 0 : index
    %20 = vector.load %arg7[%c0_15, %c0_16] : memref<1x1xf32, #tpu.memory_space<vmem>>, vector<1x1xf32>
    %21 = vector.broadcast %20 : vector<1x1xf32> to vector<8x1xf32>
    %22 = arith.addf %19, %21 : vector<8x1xf32>
    %23 = math.tanh %22 : vector<8x1xf32>
    %c0_17 = arith.constant 0 : index
    %c0_18 = arith.constant 0 : index
    %24 = vector.load %arg8[%c0_17, %c0_18] : memref<8x1xf32, #tpu.memory_space<vmem>>, vector<8x1xf32>
    tpu.vector_store %arg8[%c0_17, %c0_18], %23 {strides = array<i32>} : memref<8x1xf32, #tpu.memory_space<vmem>>, vector<8x1xf32>,
    return
  }
  func.func @transform_0(%arg0: i32) -> (i32, i32) {
    %c0_i32 = arith.constant 0 : i32
    %c0_i32_0 = arith.constant 0 : i32
    return %arg0, %c0_i32 : i32, i32
  }
  func.func @transform_1(%arg0: i32) -> (i32, i32) {
    %c0_i32 = arith.constant 0 : i32
    %c0_i32_0 = arith.constant 0 : i32
    %c0_i32_1 = arith.constant 0 : i32
    return %c0_i32, %c0_i32_0 : i32, i32
  }
  func.func @transform_2(%arg0: i32) -> (i32, i32) {
    %c0_i32 = arith.constant 0 : i32
    %c0_i32_0 = arith.constant 0 : i32
    %c0_i32_1 = arith.constant 0 : i32
    return %c0_i32, %c0_i32_0 : i32, i32
  }
  func.func @transform_3(%arg0: i32) -> (i32, i32) {
    %c0_i32 = arith.constant 0 : i32
    %c0_i32_0 = arith.constant 0 : i32
    %c0_i32_1 = arith.constant 0 : i32
    return %c0_i32, %c0_i32_0 : i32, i32
  }
  func.func @transform_4(%arg0: i32) -> (i32, i32) {
    %c0_i32 = arith.constant 0 : i32
    %c0_i32_0 = arith.constant 0 : i32
    %c0_i32_1 = arith.constant 0 : i32
    return %c0_i32, %c0_i32_0 : i32, i32
  }
  func.func @transform_5(%arg0: i32) -> (i32, i32) {
    %c0_i32 = arith.constant 0 : i32
    %c0_i32_0 = arith.constant 0 : i32
    %c0_i32_1 = arith.constant 0 : i32
    return %c0_i32, %c0_i32_0 : i32, i32
  }
  func.func @transform_6(%arg0: i32) -> (i32, i32) {
    %c0_i32 = arith.constant 0 : i32
    %c0_i32_0 = arith.constant 0 : i32
    %c0_i32_1 = arith.constant 0 : i32
    return %c0_i32, %c0_i32_0 : i32, i32
  }
  func.func @transform_7(%arg0: i32) -> (i32, i32) {
    %c0_i32 = arith.constant 0 : i32
    %c0_i32_0 = arith.constant 0 : i32
    return %arg0, %c0_i32 : i32, i32
  }
}

</mosaic_0001>

<llo_original>
// kernel: tpu_custom_call.1
$region0: #{tpu_custom_call.1}
  #allocation0 [shape = 'u32[]', space=smem, size = 0x4, offset = 0x4, fixed_abs, tag = 'smem constant byte address 0x4 - core index']
  #allocation1 [shape = 'u32[144,128]{1,0:T(1,128)}', space=vmem, size = 0x12000, scoped, tag = 'internal scratch']
  #allocation2 [shape = 'f32[1,1]{1,0:T(1,128)S(1)}', space=vmem, size = 0x200, scoped, tag = 'scoped memory for tpu_custom_call.1']
  %s0 = inlined_call_operand.vmem [shape: f32[8,384], index: 0, kind: input, shape index: {}]
  %s1 = inlined_call_operand.hbm [shape: f32[384,128], index: 1, kind: input, shape index: {}]
  %s2 = inlined_call_operand.vmem [shape: f32[1,128], index: 2, kind: input, shape index: {}]
  %s3 = inlined_call_operand.vmem [shape: f32[128,32], index: 3, kind: input, shape index: {}]
  %s4 = inlined_call_operand.vmem [shape: f32[1,32], index: 4, kind: input, shape index: {}]
  %s5 = inlined_call_operand.vmem [shape: f32[1,32], index: 5, kind: input, shape index: {}]
  %s6 = inlined_call_operand.<no memory space> [shape: f32[1,1], index: 6, kind: input, shape index: {}]
  %s7 = inlined_call_operand.vmem [shape: f32[8,1], index: 7, kind: output, shape index: {}]
  %s8 = sld [smem:[#allocation0]]
  $region42: #{tpu_custom_call.1} parent=0
    _
  %s10 = ssub.s32 1, %s8
  %s11 = scalar_select 0, %s10, %s8
  %v12 = vstv %s6
  %13 = vst [vmem:[#allocation2] sm:$0x1] %v12
  $region1: #{tpu_custom_call.1} parent=0
    #allocation3 [shape = 'u8[196608]{0}', space=vmem, size = 0x30000, scoped, tag = 'input window, operand 1, single buffered']
    #allocation4 [shape = 's32[1]{0}', space=sflag, size = 0x4, scoped, tag = 'scoped memory for tpu_custom_call.1']
    %14 = vsyncpa [#allocation4], 0
    // Predicated region
    $region2: #{tpu_custom_call.1} parent=1 // pred_check
      _
    $region3: #{tpu_custom_call.1} parent=1 // pred_check_branch
      %16 = sbr.rel (0) target = $region5
    $region4: #{tpu_custom_call.1} parent=1 // pred_region
      _
    $region5: #{tpu_custom_call.1} parent=1 // pred_fallthru
      _
    // Predicated region
    $region6: #{tpu_custom_call.1} parent=1 // pred_check
      _
    $region7: #{tpu_custom_call.1} parent=1 // pred_check_branch
      %18 = sbr.rel (0) target = $region9
    $region8: #{tpu_custom_call.1} parent=1 // pred_region
      %s20 = ssub.s32 6144, 6144
      %21 = vsyncadd [#allocation4], %s20
      %s22 = sshll.u32 [#allocation3], 4
      %s23 = int_to_ptr.vmem [resolvable:$true] %s22
      %28 = dma.hbm_to_vmem [thread:$0]  %s1, 6144, %s23, [#allocation4], 128, 128, 8
    $region9: #{tpu_custom_call.1} parent=1 // pred_fallthru
      _
    // Predicated region
    $region10: #{tpu_custom_call.1} parent=1 // pred_check
      _
    $region11: #{tpu_custom_call.1} parent=1 // pred_check_branch
      %30 = sbr.rel (0) target = $region13
    $region12: #{tpu_custom_call.1} parent=1 // pred_region
      _
    $region13: #{tpu_custom_call.1} parent=1 // pred_fallthru
      _
    // Predicated region
    $region14: #{tpu_custom_call.1} parent=1 // pred_check
      _
    $region15: #{tpu_custom_call.1} parent=1 // pred_check_branch
      %32 = sbr.rel (0) target = $region17
    $region16: #{tpu_custom_call.1} parent=1 // pred_region
      _
    $region17: #{tpu_custom_call.1} parent=1 // pred_fallthru
      _
    // Predicated region
    $region18: #{tpu_custom_call.1} parent=1 // pred_check
      _
    $region19: #{tpu_custom_call.1} parent=1 // pred_check_branch
      %34 = sbr.rel (0) target = $region21
    $region20: #{tpu_custom_call.1} parent=1 // pred_region
      _
    $region21: #{tpu_custom_call.1} parent=1 // pred_fallthru
      _
    // Predicated region
    $region22: #{tpu_custom_call.1} parent=1 // pred_check
      _
    $region23: #{tpu_custom_call.1} parent=1 // pred_check_branch
      %36 = sbr.rel (0) target = $region25
    $region24: #{tpu_custom_call.1} parent=1 // pred_region
      _
    $region25: #{tpu_custom_call.1} parent=1 // pred_fallthru
      _
    // Predicated region
    $region26: #{tpu_custom_call.1} parent=1 // pred_check
      _
    $region27: #{tpu_custom_call.1} parent=1 // pred_check_branch
      %38 = sbr.rel (0) target = $region29
    $region28: #{tpu_custom_call.1} parent=1 // pred_region
      _
    $region29: #{tpu_custom_call.1} parent=1 // pred_fallthru
      _
    // Predicated region
    $region30: #{tpu_custom_call.1} parent=1 // pred_check
      _
    $region31: #{tpu_custom_call.1} parent=1 // pred_check_branch
      %40 = sbr.rel (0) target = $region33
    $region32: #{tpu_custom_call.1} parent=1 // pred_region
      %41 = dma.done [#allocation4], 6144
    $region33: #{tpu_custom_call.1} parent=1 // pred_fallthru
      _
    %v42 = vld [vmem:[%s0] sm:$0xff]
    %v43 = vld [vmem:[%s0 + $0x8] sm:$0xff]
    %v44 = vld [vmem:[%s0 + $0x10] sm:$0xff]
    %v45 = vld [vmem:[#allocation3] sm:$0xff]
    %v46 = vld [vmem:[#allocation3 + $0x8] sm:$0xff]
    %v47 = vld [vmem:[#allocation3 + $0x10] sm:$0xff]
    %v48 = vld [vmem:[#allocation3 + $0x18] sm:$0xff]
    %v49 = vld [vmem:[#allocation3 + $0x20] sm:$0xff]
    %v50 = vld [vmem:[#allocation3 + $0x28] sm:$0xff]
    %v51 = vld [vmem:[#allocation3 + $0x30] sm:$0xff]
    %v52 = vld [vmem:[#allocation3 + $0x38] sm:$0xff]
    %v53 = vld [vmem:[#allocation3 + $0x40] sm:$0xff]
    %v54 = vld [vmem:[#allocation3 + $0x48] sm:$0xff]
    %v55 = vld [vmem:[#allocation3 + $0x50] sm:$0xff]
    %v56 = vld [vmem:[#allocation3 + $0x58] sm:$0xff]
    %v57 = vld [vmem:[#allocation3 + $0x60] sm:$0xff]
    %v58 = vld [vmem:[#allocation3 + $0x68] sm:$0xff]
    %v59 = vld [vmem:[#allocation3 + $0x70] sm:$0xff]
    %v60 = vld [vmem:[#allocation3 + $0x78] sm:$0xff]
    %v61 = vld [vmem:[#allocation3 + $0x80] sm:$0xff]
    %v62 = vld [vmem:[#allocation3 + $0x88] sm:$0xff]
    %v63 = vld [vmem:[#allocation3 + $0x90] sm:$0xff]
    %v64 = vld [vmem:[#allocation3 + $0x98] sm:$0xff]
    %v65 = vld [vmem:[#allocation3 + $0xa0] sm:$0xff]
    %v66 = vld [vmem:[#allocation3 + $0xa8] sm:$0xff]
    %v67 = vld [vmem:[#allocation3 + $0xb0] sm:$0xff]
    %v68 = vld [vmem:[#allocation3 + $0xb8] sm:$0xff]
    %v69 = vld [vmem:[#allocation3 + $0xc0] sm:$0xff]
    %v70 = vld [vmem:[#allocation3 + $0xc8] sm:$0xff]
    %v71 = vld [vmem:[#allocation3 + $0xd0] sm:$0xff]
    %v72 = vld [vmem:[#allocation3 + $0xd8] sm:$0xff]
    %v73 = vld [vmem:[#allocation3 + $0xe0] sm:$0xff]
    %v74 = vld [vmem:[#allocation3 + $0xe8] sm:$0xff]
    %v75 = vld [vmem:[#allocation3 + $0xf0] sm:$0xff]
    %v76 = vld [vmem:[#allocation3 + $0xf8] sm:$0xff]
    %v77 = vld [vmem:[#allocation3 + $0x100] sm:$0xff]
    %v78 = vld [vmem:[#allocation3 + $0x108] sm:$0xff]
    %v79 = vld [vmem:[#allocation3 + $0x110] sm:$0xff]
    %v80 = vld [vmem:[#allocation3 + $0x118] sm:$0xff]
    %v81 = vld [vmem:[#allocation3 + $0x120] sm:$0xff]
    %v82 = vld [vmem:[#allocation3 + $0x128] sm:$0xff]
    %v83 = vld [vmem:[#allocation3 + $0x130] sm:$0xff]
    %v84 = vld [vmem:[#allocation3 + $0x138] sm:$0xff]
    %v85 = vld [vmem:[#allocation3 + $0x140] sm:$0xff]
    %v86 = vld [vmem:[#allocation3 + $0x148] sm:$0xff]
    %v87 = vld [vmem:[#allocation3 + $0x150] sm:$0xff]
    %v88 = vld [vmem:[#allocation3 + $0x158] sm:$0xff]
    %v89 = vld [vmem:[#allocation3 + $0x160] sm:$0xff]
    %v90 = vld [vmem:[#allocation3 + $0x168] sm:$0xff]
    %v91 = vld [vmem:[#allocation3 + $0x170] sm:$0xff]
    %v92 = vld [vmem:[#allocation3 + $0x178] sm:$0xff]
    %v93 = vld [vmem:[%s2] sm:$0x1]
    %v95 = vlaneseq
    %v96 = vshrl.u32 %v95, 7
    %v97 = vsub.s32 0, %v96
    %v98 = vrot.slane %v93, %v97
    %100 = vmatprep.subr.mxu0 0.0
    %101 = vmatpush1.msra.mxu0 %v60
    %102 = vmatprep.subr.mxu0 0.0
    %103 = vmatpush1.msra.mxu0 %v59
    %104 = vmatprep.subr.mxu0 0.0
    %105 = vmatpush1.msra.mxu0 %v58
    %106 = vmatprep.subr.mxu0 0.0
    %107 = vmatpush1.msra.mxu0 %v57
    %108 = vmatprep.subr.mxu0 0.0
    %109 = vmatpush1.msra.mxu0 %v56
    %110 = vmatprep.subr.mxu0 0.0
    %111 = vmatpush1.msra.mxu0 %v55
    %112 = vmatprep.subr.mxu0 0.0
    %113 = vmatpush1.msra.mxu0 %v54
    %114 = vmatprep.subr.mxu0 0.0
    %115 = vmatpush1.msra.mxu0 %v53
    %116 = vmatprep.subr.mxu0 0.0
    %117 = vmatpush1.msra.mxu0 %v52
    %118 = vmatprep.subr.mxu0 0.0
    %119 = vmatpush1.msra.mxu0 %v51
    %120 = vmatprep.subr.mxu0 0.0
    %121 = vmatpush1.msra.mxu0 %v50
    %122 = vmatprep.subr.mxu0 0.0
    %123 = vmatpush1.msra.mxu0 %v49
    %124 = vmatprep.subr.mxu0 0.0
    %125 = vmatpush1.msra.mxu0 %v48
    %126 = vmatprep.subr.mxu0 0.0
    %127 = vmatpush1.msra.mxu0 %v47
    %128 = vmatprep.subr.mxu0 0.0
    %129 = vmatpush1.msra.mxu0 %v46
    %130 = vmatprep.subr.mxu0 0.0
    %131 = vmatpush1.msra.mxu0 %v45
    %132 = vmatprep.subr.mxu0 0.0
    %133 = vmatpush2.msra.mxu0 %v76
    %134 = vmatprep.subr.mxu0 0.0
    %135 = vmatpush2.msra.mxu0 %v75
    %136 = vmatprep.subr.mxu0 0.0
    %137 = vmatpush2.msra.mxu0 %v74
    %138 = vmatprep.subr.mxu0 0.0
    %139 = vmatpush2.msra.mxu0 %v73
    %140 = vmatprep.subr.mxu0 0.0
    %141 = vmatpush2.msra.mxu0 %v72
    %142 = vmatprep.subr.mxu0 0.0
    %143 = vmatpush2.msra.mxu0 %v71
    %144 = vmatprep.subr.mxu0 0.0
    %145 = vmatpush2.msra.mxu0 %v70
    %146 = vmatprep.subr.mxu0 0.0
    %147 = vmatpush2.msra.mxu0 %v69
    %148 = vmatprep.subr.mxu0 0.0
    %149 = vmatpush2.msra.mxu0 %v68
    %150 = vmatprep.subr.mxu0 0.0
    %151 = vmatpush2.msra.mxu0 %v67
    %152 = vmatprep.subr.mxu0 0.0
    %153 = vmatpush2.msra.mxu0 %v66
    %154 = vmatprep.subr.mxu0 0.0
    %155 = vmatpush2.msra.mxu0 %v65
    %156 = vmatprep.subr.mxu0 0.0
    %157 = vmatpush2.msra.mxu0 %v64
    %158 = vmatprep.subr.mxu0 0.0
    %159 = vmatpush2.msra.mxu0 %v63
    %160 = vmatprep.subr.mxu0 0.0
    %161 = vmatpush2.msra.mxu0 %v62
    %162 = vmatprep.subr.mxu0 0.0
    %163 = vmatpush2.msra.mxu0 %v61
    %164 = vmatprep.mubr.f32.mxu0 %v43
    %165 = vmatmul.mubr.f32.gmra.mxu0 %v42
    %v166 = vpop.f32.mrf.mxu0
    %v167 = vadd.f32 %v98, %v166
    %v168 = vpop.f32.mrf.mxu0
    %169 = vdwg.mxu0
    %170 = vmatprep.subr.mxu0 0.0
    %171 = vmatpush1.msra.mxu0 %v92
    %172 = vmatprep.subr.mxu0 0.0
    %173 = vmatpush1.msra.mxu0 %v91
    %174 = vmatprep.subr.mxu0 0.0
    %175 = vmatpush1.msra.mxu0 %v90
    %176 = vmatprep.subr.mxu0 0.0
    %177 = vmatpush1.msra.mxu0 %v89
    %178 = vmatprep.subr.mxu0 0.0
    %179 = vmatpush1.msra.mxu0 %v88
    %180 = vmatprep.subr.mxu0 0.0
    %181 = vmatpush1.msra.mxu0 %v87
    %182 = vmatprep.subr.mxu0 0.0
    %183 = vmatpush1.msra.mxu0 %v86
    %184 = vmatprep.subr.mxu0 0.0
    %185 = vmatpush1.msra.mxu0 %v85
    %186 = vmatprep.subr.mxu0 0.0
    %187 = vmatpush1.msra.mxu0 %v84
    %188 = vmatprep.subr.mxu0 0.0
    %189 = vmatpush1.msra.mxu0 %v83
    %190 = vmatprep.subr.mxu0 0.0
    %191 = vmatpush1.msra.mxu0 %v82
    %192 = vmatprep.subr.mxu0 0.0
    %193 = vmatpush1.msra.mxu0 %v81
    %194 = vmatprep.subr.mxu0 0.0
    %195 = vmatpush1.msra.mxu0 %v80
    %196 = vmatprep.subr.mxu0 0.0
    %197 = vmatpush1.msra.mxu0 %v79
    %198 = vmatprep.subr.mxu0 0.0
    %199 = vmatpush1.msra.mxu0 %v78
    %200 = vmatprep.subr.mxu0 0.0
    %201 = vmatpush1.msra.mxu0 %v77
    %202 = vmatprep.subr.mxu0 0.0
    %203 = vmatpush2.msra.mxu0 0.0
    %204 = vmatprep.subr.mxu0 0.0
    %205 = vmatpush2.msra.mxu0 0.0
    %206 = vmatprep.subr.mxu0 0.0
    %207 = vmatpush2.msra.mxu0 0.0
    %208 = vmatprep.subr.mxu0 0.0
    %209 = vmatpush2.msra.mxu0 0.0
    %210 = vmatprep.subr.mxu0 0.0
    %211 = vmatpush2.msra.mxu0 0.0
    %212 = vmatprep.subr.mxu0 0.0
    %213 = vmatpush2.msra.mxu0 0.0
    %214 = vmatprep.subr.mxu0 0.0
    %215 = vmatpush2.msra.mxu0 0.0
    %216 = vmatprep.subr.mxu0 0.0
    %217 = vmatpush2.msra.mxu0 0.0
    %218 = vmatprep.subr.mxu0 0.0
    %219 = vmatpush2.msra.mxu0 0.0
    %220 = vmatprep.subr.mxu0 0.0
    %221 = vmatpush2.msra.mxu0 0.0
    %222 = vmatprep.subr.mxu0 0.0
    %223 = vmatpush2.msra.mxu0 0.0
    %224 = vmatprep.subr.mxu0 0.0
    %225 = vmatpush2.msra.mxu0 0.0
    %226 = vmatprep.subr.mxu0 0.0
    %227 = vmatpush2.msra.mxu0 0.0
    %228 = vmatprep.subr.mxu0 0.0
    %229 = vmatpush2.msra.mxu0 0.0
    %230 = vmatprep.subr.mxu0 0.0
    %231 = vmatpush2.msra.mxu0 0.0
    %232 = vmatprep.subr.mxu0 0.0
    %233 = vmatpush2.msra.mxu0 0.0
    %234 = vmatprep.mubr.f32.mxu0 0.0
    %235 = vmatmul.mubr.f32.gmra.mxu0 %v44
    %v236 = vpop.f32.mrf.mxu0
    %v237 = vadd.f32 %v167, %v236
    %v238 = vpop.f32.mrf.mxu0
    %239 = vdwg.mxu0
    %v240 = vmax.f32 %v237, 0.0
    %v241 = vld [vmem:[%s3] sm:$0xff]
    %v242 = vld [vmem:[%s3 + $0x8] sm:$0xff]
    %v243 = vld [vmem:[%s3 + $0x10] sm:$0xff]
    %v244 = vld [vmem:[%s3 + $0x18] sm:$0xff]
    %v245 = vld [vmem:[%s3 + $0x20] sm:$0xff]
    %v246 = vld [vmem:[%s3 + $0x28] sm:$0xff]
    %v247 = vld [vmem:[%s3 + $0x30] sm:$0xff]
    %v248 = vld [vmem:[%s3 + $0x38] sm:$0xff]
    %v249 = vld [vmem:[%s3 + $0x40] sm:$0xff]
    %v250 = vld [vmem:[%s3 + $0x48] sm:$0xff]
    %v251 = vld [vmem:[%s3 + $0x50] sm:$0xff]
    %v252 = vld [vmem:[%s3 + $0x58] sm:$0xff]
    %v253 = vld [vmem:[%s3 + $0x60] sm:$0xff]
    %v254 = vld [vmem:[%s3 + $0x68] sm:$0xff]
    %v255 = vld [vmem:[%s3 + $0x70] sm:$0xff]
    %v256 = vld [vmem:[%s3 + $0x78] sm:$0xff]
    %v257 = vld [vmem:[%s4] sm:$0x1]
    %v259 = vlaneseq
    %v260 = vshrl.u32 %v259, 7
    %v261 = vsub.s32 0, %v260
    %v262 = vrot.slane %v257, %v261
    %264 = vmatprep.subr.mxu0 0.0
    %265 = vmatpush1.msra.mxu0 %v256
    %266 = vmatprep.subr.mxu0 0.0
    %267 = vmatpush1.msra.mxu0 %v255
    %268 = vmatprep.subr.mxu0 0.0
    %269 = vmatpush1.msra.mxu0 %v254
    %270 = vmatprep.subr.mxu0 0.0
    %271 = vmatpush1.msra.mxu0 %v253
    %272 = vmatprep.subr.mxu0 0.0
    %273 = vmatpush1.msra.mxu0 %v252
    %274 = vmatprep.subr.mxu0 0.0
    %275 = vmatpush1.msra.mxu0 %v251
    %276 = vmatprep.subr.mxu0 0.0
    %277 = vmatpush1.msra.mxu0 %v250
    %278 = vmatprep.subr.mxu0 0.0
    %279 = vmatpush1.msra.mxu0 %v249
    %280 = vmatprep.subr.mxu0 0.0
    %281 = vmatpush1.msra.mxu0 %v248
    %282 = vmatprep.subr.mxu0 0.0
    %283 = vmatpush1.msra.mxu0 %v247
    %284 = vmatprep.subr.mxu0 0.0
    %285 = vmatpush1.msra.mxu0 %v246
    %286 = vmatprep.subr.mxu0 0.0
    %287 = vmatpush1.msra.mxu0 %v245
    %288 = vmatprep.subr.mxu0 0.0
    %289 = vmatpush1.msra.mxu0 %v244
    %290 = vmatprep.subr.mxu0 0.0
    %291 = vmatpush1.msra.mxu0 %v243
    %292 = vmatprep.subr.mxu0 0.0
    %293 = vmatpush1.msra.mxu0 %v242
    %294 = vmatprep.subr.mxu0 0.0
    %295 = vmatpush1.msra.mxu0 %v241
    %296 = vmatprep.subr.mxu0 0.0
    %297 = vmatpush2.msra.mxu0 0.0
    %298 = vmatprep.subr.mxu0 0.0
    %299 = vmatpush2.msra.mxu0 0.0
    %300 = vmatprep.subr.mxu0 0.0
    %301 = vmatpush2.msra.mxu0 0.0
    %302 = vmatprep.subr.mxu0 0.0
    %303 = vmatpush2.msra.mxu0 0.0
    %304 = vmatprep.subr.mxu0 0.0
    %305 = vmatpush2.msra.mxu0 0.0
    %306 = vmatprep.subr.mxu0 0.0
    %307 = vmatpush2.msra.mxu0 0.0
    %308 = vmatprep.subr.mxu0 0.0
    %309 = vmatpush2.msra.mxu0 0.0
    %310 = vmatprep.subr.mxu0 0.0
    %311 = vmatpush2.msra.mxu0 0.0
    %312 = vmatprep.subr.mxu0 0.0
    %313 = vmatpush2.msra.mxu0 0.0
    %314 = vmatprep.subr.mxu0 0.0
    %315 = vmatpush2.msra.mxu0 0.0
    %316 = vmatprep.subr.mxu0 0.0
    %317 = vmatpush2.msra.mxu0 0.0
    %318 = vmatprep.subr.mxu0 0.0
    %319 = vmatpush2.msra.mxu0 0.0
    %320 = vmatprep.subr.mxu0 0.0
    %321 = vmatpush2.msra.mxu0 0.0
    %322 = vmatprep.subr.mxu0 0.0
    %323 = vmatpush2.msra.mxu0 0.0
    %324 = vmatprep.subr.mxu0 0.0
    %325 = vmatpush2.msra.mxu0 0.0
    %326 = vmatprep.subr.mxu0 0.0
    %327 = vmatpush2.msra.mxu0 0.0
    %328 = vmatprep.mubr.f32.mxu0 0.0
    %329 = vmatmul.mubr.f32.gmra.mxu0 %v240
    %v330 = vpop.f32.mrf.mxu0
    %v331 = vadd.f32 %v262, %v330
    %v332 = vpop.f32.mrf.mxu0
    %333 = vdwg.mxu0
    %v334 = vmax.f32 %v331, 0.0
    %v335 = vld [vmem:[%s5] sm:$0x1]
    %v337 = vlaneseq
    %v338 = vshrl.u32 %v337, 7
    %v339 = vsub.s32 0, %v338
    %v340 = vrot.slane %v335, %v339
    %v342 = vmul.f32 %v334, %v340
    %vm343 = vcmask 261120
    %v344 = vsel %vm343, %v342, 0.0
    %345 = vadd.xlane.f32.xlu0 %v344
    %v346 = vpop.xlane.xlu0 %345
    %v347 = vld [vmem:[#allocation2] sm:$0x1]
    %v349 = vlaneseq
    %v350 = vshrl.u32 %v349, 7
    %v351 = vsub.s32 0, %v350
    %v352 = vrot.slane %v347, %v351
    %v354 = vadd.f32 %v346, %v352
    %v355 = vtanh.pop %v354
    %vm356 = vcmask 7168
    %357 = vst.msk [vmem:[%s7] sm:$0xff] %vm356, %v355
    // Predicated region
    $region34: #{tpu_custom_call.1} parent=1 // pred_check
      _
    $region35: #{tpu_custom_call.1} parent=1 // pred_check_branch
      %359 = sbr.rel (0) target = $region37
    $region36: #{tpu_custom_call.1} parent=1 // pred_region
      _
    $region37: #{tpu_custom_call.1} parent=1 // pred_fallthru
      _
    // Predicated region
    $region38: #{tpu_custom_call.1} parent=1 // pred_check
      _
    $region39: #{tpu_custom_call.1} parent=1 // pred_check_branch
      %361 = sbr.rel (0) target = $region41
    $region40: #{tpu_custom_call.1} parent=1 // pred_region
      _
    $region41: #{tpu_custom_call.1} parent=1 // pred_fallthru
      _
    %362 = vsyncpa [#allocation4], 1

</llo_original>
